<compile_context>
chip_gen: v6e
topology: v6e:2x2x1
jax: 0.10.0
libtpu: 0.0.40
codegen_flags: <defaults>
</compile_context>

<pallas_src>
import functools

import jax
import jax.numpy as jnp
from jax.experimental import pallas as pl
from jax.experimental.pallas import tpu as pltpu

NUM_CLASSES = 8
HIDDEN = 32
NUM_BOX = 4          # real box rows
BOX_ROWS = 8         # box rows padded to a sublane boundary in the fused head
OUT_ROWS = 8         # fused output slab height
SCORE_ROW = 4
LABEL_ROW = 5


# ----------------------------- Pallas kernel ------------------------------ #
def det_head_kernel(x_ref, w1t_ref, b1t_ref, wht_ref, bht_ref, out_ref,
                    *, num_box, box_rows, w_img):
    tile = x_ref.shape[-1]
    # In-kernel cast to bf16 feeds the MXU natively; HBM read stays f32
    # (a wrapper-side cast would cost an extra HBM read+write pass).
    x = x_ref[...].astype(jnp.bfloat16)                       # (C, T)

    # 1x1-conv "backbone": (HIDDEN, C) @ (C, T), f32 accumulation, ReLU in f32.
    h = jnp.dot(w1t_ref[...], x, preferred_element_type=jnp.float32)
    h = jnp.maximum(h + b1t_ref[...], 0.0)                    # (HIDDEN, T) f32

    # Fused (padded) box + class head: (16, HIDDEN) @ (HIDDEN, T) + bias.
    head = jnp.dot(wht_ref[...], h.astype(jnp.bfloat16),
                   preferred_element_type=jnp.float32) + bht_ref[...]
    logits = head[box_rows:, :]                                # (K, T), aligned

    # score = max softmax prob = 1 / sum(exp(logits - max))  (EUP reciprocal).
    m = jnp.max(logits, axis=0, keepdims=True)                 # (1, T)
    l = jnp.sum(jnp.exp(logits - m), axis=0, keepdims=True)    # (1, T)
    scores = jnp.minimum(pl.reciprocal(l, approx=True), 1.0)   # clamp ulp>1

    # label = argmax over classes (ties -> lowest index, same as torch).
    k = logits.shape[0]
    cls = jax.lax.broadcasted_iota(jnp.int32, logits.shape, 0)
    labels = jnp.min(jnp.where(logits == m, cls, k), axis=0, keepdims=True)
    labels_f = pltpu.bitcast(labels.astype(jnp.int32), jnp.float32)

    # Anchor grid folded in; per-image position p = i*tile + lane.
    p = (pl.program_id(1) * tile
         + jax.lax.broadcasted_iota(jnp.int32, (1, tile), 1))
    if (w_img & (w_img - 1)) == 0:                 # power-of-two W: shift/mask
        cy = (p >> (w_img.bit_length() - 1)).astype(jnp.float32) + 0.5
        cx = (p & (w_img - 1)).astype(jnp.float32) + 0.5
    else:
        cy = (p // w_img).astype(jnp.float32) + 0.5
        cx = (p % w_img).astype(jnp.float32) + 0.5
    row4 = jax.lax.broadcasted_iota(jnp.int32, (num_box, tile), 0)
    anchors = jnp.where((row4 & 1) == 0, cx, cy)               # x1,y1,x2,y2

    boxes = head[:num_box, :] + anchors                        # (4, T)

    # One dense (8, T) slab: boxes | score | labels(bitcast) | zero pad.
    out_ref[...] = jnp.concatenate(
        [boxes, scores, labels_f, jnp.zeros((2, tile), jnp.float32)], axis=0)


def _pick_tile(hw, batch):
    # Largest lane-aligned tile dividing HW (bigger tiles amortize the
    # ~0.35us/step overhead and give dense DMAs); fall back to full extent.
    tile = hw
    for t in (32768, 16384, 8192, 4096, 2048, 1024, 512, 256, 128):
        if hw % t == 0:
            tile = t
            break
    # v7x has 2 TensorCores: make sure the parallel grid has >= 2 total steps.
    if batch * (hw // tile) < 2 and tile % 256 == 0:
        tile //= 2
    return tile


def run_det_head(x, w1t, b1t, wht, bht, *, w_img):
    """x: (B, C, HW) f32.  Returns fused slab (B, 8, HW) f32."""
    B, C, HW = x.shape
    Hd = w1t.shape[0]
    KB = wht.shape[0]                          # BOX_ROWS + num_classes
    K = KB - BOX_ROWS
    tile = _pick_tile(HW, B)
    grid = (B, HW // tile)

    kernel = functools.partial(det_head_kernel, num_box=NUM_BOX,
                               box_rows=BOX_ROWS, w_img=w_img)

    def pinned(shape):
        # Constant index map -> weights stay VMEM-resident across the grid.
        # TODO(synk): pipeline_mode=pl.Buffered(1) would drop the second copy;
        # skipped since VMEM is nowhere near a constraint here.
        return pl.BlockSpec(shape, lambda b, i: (0,) * len(shape))

    cost = pl.CostEstimate(
        flops=2 * B * HW * (C * Hd + Hd * KB),
        transcendentals=B * HW * K,
        bytes_accessed=(4 * B * HW * C + 4 * B * HW * OUT_ROWS
                        + 2 * (C * Hd + Hd * KB) + 4 * (Hd + KB)),
    )

    slab = pl.pallas_call(
        kernel,
        grid=grid,
        in_specs=[
            # x: (B, C, HW) -> kernel sees (C, tile); batch dim squeezed.
            pl.BlockSpec((pl.Squeezed(), C, tile), lambda b, i: (b, 0, i)),
            pinned((Hd, C)),                   # w1^T   (bf16)
            pinned((Hd, 1)),                   # b1     (f32)
            pinned((KB, Hd)),                  # fused head weight^T (bf16)
            pinned((KB, 1)),                   # fused head bias     (f32)
        ],
        out_specs=pl.BlockSpec((pl.Squeezed(), OUT_ROWS, tile),
                               lambda b, i: (b, 0, i)),
        out_shape=jax.ShapeDtypeStruct((B, OUT_ROWS, HW), jnp.float32),
        compiler_params=pltpu.CompilerParams(
            dimension_semantics=("parallel", "parallel")),
        cost_estimate=cost,
    )(x, w1t, b1t, wht, bht)
    return slab


# -------------------------- synthetic detector ----------------------------- #
class TinyDetector:
    """Toy single-shot detector: returns a List[Dict] (one dict per image),
    matching the torchvision-style interface TraceWrapper expects."""

    def __init__(self, in_channels, hidden=HIDDEN, num_classes=NUM_CLASSES):
        key = jax.random.PRNGKey(0)
        k1, k2, k3 = jax.random.split(key, 3)
        # Backbone weight (pre-transposed for the lane-dense (., M) layout).
        w1t = (jax.random.normal(k1, (hidden, in_channels), jnp.float32)
               * (1.0 / jnp.sqrt(in_channels)))                # (HIDDEN, C)
        self.w1t = w1t.astype(jnp.bfloat16)
        self.b1t = jnp.zeros((hidden, 1), jnp.float32)

        wbt = (jax.random.normal(k2, (NUM_BOX, hidden), jnp.float32)
               * (1.0 / jnp.sqrt(hidden)))                     # (4, HIDDEN)
        wct = (jax.random.normal(k3, (num_classes, hidden), jnp.float32)
               * (1.0 / jnp.sqrt(hidden)))                     # (K, HIDDEN)
        # Fused head, box rows padded 4 -> 8 with zeros (class rows NOT padded
        # so the in-kernel max/sum/argmax stay exact).
        wht = jnp.concatenate(
            [wbt, jnp.zeros((BOX_ROWS - NUM_BOX, hidden), jnp.float32), wct],
            axis=0)                                            # (16, HIDDEN)
        self.wht = wht.astype(jnp.bfloat16)
        self.bht = jnp.zeros((BOX_ROWS + num_classes, 1), jnp.float32)

    def __call__(self, images, targets=None):
        # images: NCHW. Free-view reshape to (B, C, H*W) -- no XLA transpose.
        B, C, H, W = images.shape
        HW = H * W
        x = images.reshape(B, C, HW)

        slab = run_det_head(x, self.w1t, self.b1t, self.wht, self.bht,
                            w_img=W)                           # (B, 8, HW)

        # Interface transpose to torchvision's (N, 4); downstream consumers
        # could take the lane-dense (4, HW) layout directly and skip this.
        boxes = jnp.transpose(slab[:, :NUM_BOX, :], (0, 2, 1))  # (B, HW, 4)
        scores = slab[:, SCORE_ROW, :]                           # (B, HW)
        labels = jax.lax.bitcast_convert_type(
            slab[:, LABEL_ROW, :], jnp.int32)                    # (B, HW)

        # One dict per image, torchvision detection style.
        # TODO(synk): no 'masks' branch — toy detector has no mask head.
        return [
            {"boxes": boxes[b], "scores": scores[b], "labels": labels[b]}
            for b in range(B)
        ]


def dict_to_tuple(out_dict):
    if "masks" in out_dict.keys():
        return (out_dict["boxes"], out_dict["scores"], out_dict["labels"],
                out_dict["masks"])
    return (out_dict["boxes"], out_dict["scores"], out_dict["labels"])


class TraceWrapper:
    """JAX equivalent of the PyTorch TraceWrapper module."""

    def __init__(self, model):
        self.model = model

    def __call__(self, images, targets=None):
        out = self.model(images, targets)
        return dict_to_tuple(out[0])


# --------------------------------- main ------------------------------------ #
if __name__ == "__main__":
    B, C, H, W = 2, 4, 16, 16
    key = jax.random.PRNGKey(0)
    images = jax.random.normal(key, (B, C, H, W), jnp.float32)  # NCHW

    model = TinyDetector(in_channels=C)
    wrapper = TraceWrapper(model)

    boxes, scores, labels = wrapper(images)
    jax.block_until_ready((boxes, scores, labels))

    assert boxes.shape == (H * W, 4) and boxes.dtype == jnp.float32
    assert scores.shape == (H * W,) and scores.dtype == jnp.float32
    assert labels.shape == (H * W,) and labels.dtype == jnp.int32
    assert bool(jnp.all(jnp.isfinite(boxes)))
    assert bool(jnp.all((scores > 0.0) & (scores <= 1.0)))
    assert bool(jnp.all((labels >= 0) & (labels < NUM_CLASSES)))

    print("KERNEL_OK")
</pallas_src>

<mosaic_0001>
module attributes {stable_mosaic.version = 11 : i64} {
  func.func @det_head_kernel(%arg0: i32, %arg1: i32, %arg2: memref<1x4x256xf32, #tpu.memory_space<vmem>>, %arg3: memref<32x4xbf16, #tpu.memory_space<vmem>>, %arg4: memref<32x1xf32, #tpu.memory_space<vmem>>, %arg5: memref<16x32xbf16, #tpu.memory_space<vmem>>, %arg6: memref<16x1xf32, #tpu.memory_space<vmem>>, %arg7: memref<1x8x256xf32, #tpu.memory_space<vmem>>) attributes {dimension_semantics = [#tpu.dimension_semantics<parallel>, #tpu.dimension_semantics<parallel>], iteration_bounds = array<i64: 2, 1>, scalar_prefetch = 0 : i64, scratch_operands = 0 : i64, tpu.core_type = #tpu.core_type<tc>, window_params = [{transform_indices = @transform_0, window_bounds = array<i64: 1, 4, 256>}, {pipeline_mode = #tpu.pipeline_mode<synchronous>, transform_indices = @transform_1, window_bounds = array<i64: 32, 4>}, {pipeline_mode = #tpu.pipeline_mode<synchronous>, transform_indices = @transform_2, window_bounds = array<i64: 32, 1>}, {pipeline_mode = #tpu.pipeline_mode<synchronous>, transform_indices = @transform_3, window_bounds = array<i64: 16, 32>}, {pipeline_mode = #tpu.pipeline_mode<synchronous>, transform_indices = @transform_4, window_bounds = array<i64: 16, 1>}, {transform_indices = @transform_5, window_bounds = array<i64: 1, 8, 256>}]} {
    %c0 = arith.constant 0 : index
    %c0_0 = arith.constant 0 : index
    %c0_1 = arith.constant 0 : index
    %0 = vector.load %arg2[%c0, %c0_0, %c0_1] : memref<1x4x256xf32, #tpu.memory_space<vmem>>, vector<1x4x256xf32>
    %1 = vector.shape_cast %0 : vector<1x4x256xf32> to vector<4x256xf32>
    %2 = arith.truncf %1 : vector<4x256xf32> to vector<4x256xbf16>
    %c0_2 = arith.constant 0 : index
    %c0_3 = arith.constant 0 : index
    %3 = vector.load %arg3[%c0_2, %c0_3] : memref<32x4xbf16, #tpu.memory_space<vmem>>, vector<32x4xbf16>
    %cst = arith.constant dense<0.000000e+00> : vector<32x256xf32>
    %4 = tpu.matmul %3, %2, %cst {dimension_numbers = #tpu.dot_dimension_numbers<[1], [0], [0], [1], [0, 0, 1, 1], [], []>} : vector<32x4xbf16>, vector<4x256xbf16>, vector<32x256xf32> -> vector<32x256xf32>
    %c0_4 = arith.constant 0 : index
    %c0_5 = arith.constant 0 : index
    %5 = vector.load %arg4[%c0_4, %c0_5] : memref<32x1xf32, #tpu.memory_space<vmem>>, vector<32x1xf32>
    %6 = vector.broadcast %5 : vector<32x1xf32> to vector<32x256xf32>
    %7 = arith.addf %4, %6 : vector<32x256xf32>
    %cst_6 = arith.constant 0.000000e+00 : f32
    %8 = vector.broadcast %cst_6 : f32 to vector<32x256xf32>
    %9 = arith.maximumf %7, %8 : vector<32x256xf32>
    %c0_7 = arith.constant 0 : index
    %c0_8 = arith.constant 0 : index
    %10 = vector.load %arg5[%c0_7, %c0_8] : memref<16x32xbf16, #tpu.memory_space<vmem>>, vector<16x32xbf16>
    %11 = arith.truncf %9 : vector<32x256xf32> to vector<32x256xbf16>
    %cst_9 = arith.constant dense<0.000000e+00> : vector<16x256xf32>
    %12 = tpu.matmul %10, %11, %cst_9 {dimension_numbers = #tpu.dot_dimension_numbers<[1], [0], [0], [1], [0, 0, 1, 1], [], []>} : vector<16x32xbf16>, vector<32x256xbf16>, vector<16x256xf32> -> vector<16x256xf32>
    %c0_10 = arith.constant 0 : index
    %c0_11 = arith.constant 0 : index
    %13 = vector.load %arg6[%c0_10, %c0_11] : memref<16x1xf32, #tpu.memory_space<vmem>>, vector<16x1xf32>
    %14 = vector.broadcast %13 : vector<16x1xf32> to vector<16x256xf32>
    %15 = arith.addf %12, %14 : vector<16x256xf32>
    %16 = vector.extract_strided_slice %15 {offsets = [8, 0], sizes = [8, 256], strides = [1, 1]} : vector<16x256xf32> to vector<8x256xf32>
    %cst_12 = arith.constant dense<0xFF800000> : vector<256xf32>
    %17 = vector.multi_reduction <maximumf>, %16, %cst_12 [0] : vector<8x256xf32> to vector<256xf32>
    %18 = vector.shape_cast %17 : vector<256xf32> to vector<1x256xf32>
    %19 = vector.broadcast %18 : vector<1x256xf32> to vector<8x256xf32>
    %20 = arith.subf %16, %19 : vector<8x256xf32>
    %21 = math.exp %20 : vector<8x256xf32>
    %cst_13 = arith.constant dense<0.000000e+00> : vector<256xf32>
    %22 = vector.multi_reduction <add>, %21, %cst_13 [0] : vector<8x256xf32> to vector<256xf32>
    %23 = vector.shape_cast %22 : vector<256xf32> to vector<1x256xf32>
    %24 = tpu.reciprocal %23 {approx = true} : vector<1x256xf32> -> vector<1x256xf32>
    %cst_14 = arith.constant 1.000000e+00 : f32
    %25 = vector.broadcast %cst_14 : f32 to vector<1x256xf32>
    %26 = arith.minimumf %24, %25 : vector<1x256xf32>
    %27 = tpu.iota {dimensions = array<i32: 0>} : vector<8x256xi32>
    %28 = vector.broadcast %18 : vector<1x256xf32> to vector<8x256xf32>
    %29 = arith.cmpf oeq, %16, %28 : vector<8x256xf32>
    %c8_i32 = arith.constant 8 : i32
    %30 = vector.broadcast %c8_i32 : i32 to vector<8x256xi32>
    %31 = arith.select %29, %27, %30 : vector<8x256xi1>, vector<8x256xi32>
    %cst_15 = arith.constant dense<2147483647> : vector<256xi32>
    %32 = vector.multi_reduction <minsi>, %31, %cst_15 [0] : vector<8x256xi32> to vector<256xi32>
    %33 = vector.shape_cast %32 : vector<256xi32> to vector<1x256xi32>
    %34 = tpu.bitcast %33 : vector<1x256xi32> -> vector<1x256xf32>
    %c256_i32 = arith.constant 256 : i32
    %35 = arith.muli %arg1, %c256_i32 : i32
    %36 = tpu.iota {dimensions = array<i32: 1>} : vector<1x256xi32>
    %37 = vector.broadcast %35 : i32 to vector<1x256xi32>
    %38 = arith.addi %37, %36 : vector<1x256xi32>
    %c4_i32 = arith.constant 4 : i32
    %39 = vector.broadcast %c4_i32 : i32 to vector<1x256xi32>
    %40 = arith.shrsi %38, %39 : vector<1x256xi32>
    %41 = arith.sitofp %40 : vector<1x256xi32> to vector<1x256xf32>
    %cst_16 = arith.constant 5.000000e-01 : f32
    %42 = vector.broadcast %cst_16 : f32 to vector<1x256xf32>
    %43 = arith.addf %41, %42 : vector<1x256xf32>
    %c15_i32 = arith.constant 15 : i32
    %44 = vector.broadcast %c15_i32 : i32 to vector<1x256xi32>
    %45 = arith.andi %38, %44 : vector<1x256xi32>
    %46 = arith.sitofp %45 : vector<1x256xi32> to vector<1x256xf32>
    %cst_17 = arith.constant 5.000000e-01 : f32
    %47 = vector.broadcast %cst_17 : f32 to vector<1x256xf32>
    %48 = arith.addf %46, %47 : vector<1x256xf32>
    %49 = tpu.iota {dimensions = array<i32: 0>} : vector<4x256xi32>
    %c1_i32 = arith.constant 1 : i32
    %50 = vector.broadcast %c1_i32 : i32 to vector<4x256xi32>
    %51 = arith.andi %49, %50 : vector<4x256xi32>
    %c0_i32 = arith.constant 0 : i32
    %52 = vector.broadcast %c0_i32 : i32 to vector<4x256xi32>
    %53 = arith.cmpi eq, %51, %52 : vector<4x256xi32>
    %54 = vector.shape_cast %48 : vector<1x256xf32> to vector<1x256xf32>
    %55 = vector.broadcast %54 : vector<1x256xf32> to vector<4x256xf32>
    %56 = vector.shape_cast %43 : vector<1x256xf32> to vector<1x256xf32>
    %57 = vector.broadcast %56 : vector<1x256xf32> to vector<4x256xf32>
    %58 = arith.select %53, %55, %57 : vector<4x256xi1>, vector<4x256xf32>
    %59 = vector.extract_strided_slice %15 {offsets = [0, 0], sizes = [4, 256], strides = [1, 1]} : vector<16x256xf32> to vector<4x256xf32>
    %60 = arith.addf %59, %58 : vector<4x256xf32>
    %cst_18 = arith.constant 0.000000e+00 : f32
    %61 = vector.broadcast %cst_18 : f32 to vector<2x256xf32>
    %62 = tpu.concatenate %60, %26, %34, %61 in 0 : vector<4x256xf32>, vector<1x256xf32>, vector<1x256xf32>, vector<2x256xf32> -> vector<8x256xf32>
    %c0_19 = arith.constant 0 : index
    %c0_20 = arith.constant 0 : index
    %c0_21 = arith.constant 0 : index
    %63 = vector.load %arg7[%c0_19, %c0_20, %c0_21] : memref<1x8x256xf32, #tpu.memory_space<vmem>>, vector<1x8x256xf32>
    %64 = vector.shape_cast %63 : vector<1x8x256xf32> to vector<8x256xf32>
    %65 = vector.shape_cast %62 : vector<8x256xf32> to vector<1x8x256xf32>
    tpu.vector_store %arg7[%c0_19, %c0_20, %c0_21], %65 {strides = array<i32>} : memref<1x8x256xf32, #tpu.memory_space<vmem>>, vector<1x8x256xf32>,
    return
  }
  func.func @transform_0(%arg0: i32, %arg1: i32) -> (i32, i32, i32) {
    %c0_i32 = arith.constant 0 : i32
    %c0_i32_0 = arith.constant 0 : i32
    return %arg0, %c0_i32, %arg1 : i32, i32, i32
  }
  func.func @transform_1(%arg0: i32, %arg1: i32) -> (i32, i32) {
    %c0_i32 = arith.constant 0 : i32
    %c0_i32_0 = arith.constant 0 : i32
    %c0_i32_1 = arith.constant 0 : i32
    return %c0_i32, %c0_i32_0 : i32, i32
  }
  func.func @transform_2(%arg0: i32, %arg1: i32) -> (i32, i32) {
    %c0_i32 = arith.constant 0 : i32
    %c0_i32_0 = arith.constant 0 : i32
    %c0_i32_1 = arith.constant 0 : i32
    return %c0_i32, %c0_i32_0 : i32, i32
  }
  func.func @transform_3(%arg0: i32, %arg1: i32) -> (i32, i32) {
    %c0_i32 = arith.constant 0 : i32
    %c0_i32_0 = arith.constant 0 : i32
    %c0_i32_1 = arith.constant 0 : i32
    return %c0_i32, %c0_i32_0 : i32, i32
  }
  func.func @transform_4(%arg0: i32, %arg1: i32) -> (i32, i32) {
    %c0_i32 = arith.constant 0 : i32
    %c0_i32_0 = arith.constant 0 : i32
    %c0_i32_1 = arith.constant 0 : i32
    return %c0_i32, %c0_i32_0 : i32, i32
  }
  func.func @transform_5(%arg0: i32, %arg1: i32) -> (i32, i32, i32) {
    %c0_i32 = arith.constant 0 : i32
    %c0_i32_0 = arith.constant 0 : i32
    return %arg0, %c0_i32, %arg1 : i32, i32, i32
  }
}

</mosaic_0001>

<llo_original>
// kernel: tpu_custom_call.1
$region0: #{tpu_custom_call.1}
  #allocation0 [shape = 'u32[]', space=smem, size = 0x4, offset = 0x4, fixed_abs, tag = 'smem constant byte address 0x4 - core index']
  #allocation1 [shape = 'u32[144,128]{1,0:T(1,128)}', space=vmem, size = 0x12000, scoped, tag = 'internal scratch']
  %s0 = inlined_call_operand.vmem [shape: f32[2,4,256], index: 0, kind: input, shape index: {}]
  %s1 = inlined_call_operand.vmem [shape: bf16[32,4], index: 1, kind: input, shape index: {}]
  %s2 = inlined_call_operand.vmem [shape: f32[32,1], index: 2, kind: input, shape index: {}]
  %s3 = inlined_call_operand.vmem [shape: bf16[16,32], index: 3, kind: input, shape index: {}]
  %s4 = inlined_call_operand.vmem [shape: f32[16,1], index: 4, kind: input, shape index: {}]
  %s5 = inlined_call_operand.hbm [shape: f32[2,8,256], index: 5, kind: output, shape index: {}]
  %s6 = sld [smem:[#allocation0]]
  $region53: #{tpu_custom_call.1} parent=0
    _
  %s8 = ssub.s32 1, %s6
  %s9 = scalar_select 0, %s8, %s6
  $region1: #{tpu_custom_call.1} parent=0
    #allocation2 [shape = 'u8[16384]{0}', space=vmem, size = 0x4000, scoped, tag = 'output window, operand 0']
    #allocation3 [shape = 's32[2]{0}', space=sflag, size = 0x8, scoped, tag = 'scoped memory for tpu_custom_call.1']
    %10 = vsyncpa [#allocation3], 0
    %s11 = scalar_lea.sflag [#allocation3], 1
    %12 = vsyncpa %s11, 0
    loop: start=0, step=1, limit=4
    $region2: #{tpu_custom_call.1} parent=1 // loop_pre_header
      _
    $region3: #{tpu_custom_call.1} parent=1 // loop_header
      %s14 = sphi 0, %s18
      %p15 = scmp.ge.s32.totalorder %s14, 4
      %s21 = sphi 0, %s33
      %s22 = sphi 0, %s29
      %s23 = sphi 0, %s21
      %s24 = sphi 0, %s22
      %s25 = sphi 0, %s23
      %s26 = sphi 0, %s24
      %s38 = sphi 0, %s40
      %s41 = sphi 0, %s38
      %s42 = sphi 0, %s41
      %s58 = sphi 0, %s42
      %s62 = sphi 0, %s62
      %s64 = sphi 0, %s62
      %s65 = sphi 0, %s64
      %s79 = sphi 0, %s65
      %s83 = sphi 0, %s83
      %s85 = sphi 0, %s83
      %s86 = sphi 0, %s85
      %s100 = sphi 0, %s86
      %s104 = sphi 0, %s104
      %s106 = sphi 0, %s104
      %s107 = sphi 0, %s106
      %s121 = sphi 0, %s107
      %s125 = sphi 0, %s125
      %s127 = sphi 0, %s125
      %s128 = sphi 0, %s127
      %s142 = sphi 0, %s128
      %s150 = sphi 0, %s152
      %s153 = sphi 0, %s150
      %s154 = sphi 0, %s153
      %s170 = sphi 0, %s154
    $region4: #{tpu_custom_call.1} parent=1 // loop_header_branch
      %17 = sbr.rel (%p15) target = $region8
    $region5: #{tpu_custom_call.1} parent=1 // loop_body
      %s19 = ssub.s32 %s14, 1
      %s20 = ssub.s32 %s14, 2
      %s27 = sadd.s32 1, %s22
      %p28 = scmp.ge.s32.totalorder %s27, 1
      %s29 = scalar_select %p28, 0, %s27
      %s30 = sadd.s32 1, %s21
      %s31 = scalar_select %p28, %s30, %s21
      %p32 = scmp.ge.s32.totalorder %s31, 2
      %s33 = scalar_select %p32, 0, %s31
      %s34 = ssub.s32 %s21, %s33
      %s35 = ssub.s32 %s22, %s29
      %s36 = sor.u32 %s34, %s35
      %p37 = scmp.eq.s32.totalorder %s36, 0
      %s39 = sadd.s32 %s38, 1
      %s40 = scalar_select %p37, %s38, %s39
      %p43 = pneg %p37
      %p44 = scmp.eq.s32.totalorder %s14, 1
      %p45 = por %p43, %p44
      %p46 = scmp.ne.s32.totalorder %s38, %s41
      %p47 = scmp.eq.s32.totalorder %s14, 0
      %p48 = por %p46, %p47
      %p49 = scmp.ne.s32.totalorder %s38, %s41
      %p50 = scmp.eq.s32.totalorder %s19, 1
      %p51 = por %p49, %p50
      %p52 = scmp.ne.s32.totalorder %s41, %s42
      %p53 = scmp.eq.s32.totalorder %s19, 0
      %p54 = por %p52, %p53
      %p55 = scmp.ne.s32.totalorder %s41, %s42
      %p56 = scmp.eq.s32.totalorder %s20, 1
      %p57 = por %p55, %p56
      %p59 = scmp.ne.s32.totalorder %s42, %s58
      %p60 = scmp.eq.s32.totalorder %s20, 0
      %p61 = por %p59, %p60
      %s63 = sadd.s32 %s62, 1
      %p66 = scmp.eq.s32.totalorder %s14, 1
      %p67 = scmp.ne.s32.totalorder %s62, %s64
      %p68 = scmp.eq.s32.totalorder %s14, 0
      %p69 = por %p67, %p68
      %p70 = scmp.ne.s32.totalorder %s62, %s64
      %p71 = scmp.eq.s32.totalorder %s19, 1
      %p72 = por %p70, %p71
      %p73 = scmp.ne.s32.totalorder %s64, %s65
      %p74 = scmp.eq.s32.totalorder %s19, 0
      %p75 = por %p73, %p74
      %p76 = scmp.ne.s32.totalorder %s64, %s65
      %p77 = scmp.eq.s32.totalorder %s20, 1
      %p78 = por %p76, %p77
      %p80 = scmp.ne.s32.totalorder %s65, %s79
      %p81 = scmp.eq.s32.totalorder %s20, 0
      %p82 = por %p80, %p81
      %s84 = sadd.s32 %s83, 1
      %p87 = scmp.eq.s32.totalorder %s14, 1
      %p88 = scmp.ne.s32.totalorder %s83, %s85
      %p89 = scmp.eq.s32.totalorder %s14, 0
      %p90 = por %p88, %p89
      %p91 = scmp.ne.s32.totalorder %s83, %s85
      %p92 = scmp.eq.s32.totalorder %s19, 1
      %p93 = por %p91, %p92
      %p94 = scmp.ne.s32.totalorder %s85, %s86
      %p95 = scmp.eq.s32.totalorder %s19, 0
      %p96 = por %p94, %p95
      %p97 = scmp.ne.s32.totalorder %s85, %s86
      %p98 = scmp.eq.s32.totalorder %s20, 1
      %p99 = por %p97, %p98
      %p101 = scmp.ne.s32.totalorder %s86, %s100
      %p102 = scmp.eq.s32.totalorder %s20, 0
      %p103 = por %p101, %p102
      %s105 = sadd.s32 %s104, 1
      %p108 = scmp.eq.s32.totalorder %s14, 1
      %p109 = scmp.ne.s32.totalorder %s104, %s106
      %p110 = scmp.eq.s32.totalorder %s14, 0
      %p111 = por %p109, %p110
      %p112 = scmp.ne.s32.totalorder %s104, %s106
      %p113 = scmp.eq.s32.totalorder %s19, 1
      %p114 = por %p112, %p113
      %p115 = scmp.ne.s32.totalorder %s106, %s107
      %p116 = scmp.eq.s32.totalorder %s19, 0
      %p117 = por %p115, %p116
      %p118 = scmp.ne.s32.totalorder %s106, %s107
      %p119 = scmp.eq.s32.totalorder %s20, 1
      %p120 = por %p118, %p119
      %p122 = scmp.ne.s32.totalorder %s107, %s121
      %p123 = scmp.eq.s32.totalorder %s20, 0
      %p124 = por %p122, %p123
      %s126 = sadd.s32 %s125, 1
      %p129 = scmp.eq.s32.totalorder %s14, 1
      %p130 = scmp.ne.s32.totalorder %s125, %s127
      %p131 = scmp.eq.s32.totalorder %s14, 0
      %p132 = por %p130, %p131
      %p133 = scmp.ne.s32.totalorder %s125, %s127
      %p134 = scmp.eq.s32.totalorder %s19, 1
      %p135 = por %p133, %p134
      %p136 = scmp.ne.s32.totalorder %s127, %s128
      %p137 = scmp.eq.s32.totalorder %s19, 0
      %p138 = por %p136, %p137
      %p139 = scmp.ne.s32.totalorder %s127, %s128
      %p140 = scmp.eq.s32.totalorder %s20, 1
      %p141 = por %p139, %p140
      %p143 = scmp.ne.s32.totalorder %s128, %s142
      %p144 = scmp.eq.s32.totalorder %s20, 0
      %p145 = por %p143, %p144
      %s146 = ssub.s32 %s21, %s33
      %s147 = ssub.s32 %s22, %s29
      %s148 = sor.u32 %s146, %s147
      %p149 = scmp.eq.s32.totalorder %s148, 0
      %s151 = sadd.s32 %s150, 1
      %s152 = scalar_select %p149, %s150, %s151
      %p155 = pneg %p149
      %p156 = scmp.eq.s32.totalorder %s14, 1
      %p157 = por %p155, %p156
      %p158 = scmp.ne.s32.totalorder %s150, %s153
      %p159 = scmp.eq.s32.totalorder %s14, 0
      %p160 = por %p158, %p159
      %p161 = scmp.ne.s32.totalorder %s150, %s153
      %p162 = scmp.eq.s32.totalorder %s19, 1
      %p163 = por %p161, %p162
      %p164 = scmp.ne.s32.totalorder %s153, %s154
      %p165 = scmp.eq.s32.totalorder %s19, 0
      %p166 = por %p164, %p165
      %p167 = scmp.ne.s32.totalorder %s153, %s154
      %p168 = scmp.eq.s32.totalorder %s20, 1
      %p169 = por %p167, %p168
      %p171 = scmp.ne.s32.totalorder %s154, %s170
      %p172 = scmp.eq.s32.totalorder %s20, 0
      %p173 = por %p171, %p172
      %p174 = scmp.le.s32.totalorder 1, %s14
      %p175 = scmp.lt.s32.totalorder %s14, 3
      %p176 = pnand %p174, %p175
      %p177 = pneg %p176
      // Predicated region
      $region9: #{tpu_custom_call.1} parent=5 // pred_check
        _
      $region10: #{tpu_custom_call.1} parent=5 // pred_check_branch
        %179 = sbr.rel (%p176) target = $region12
      $region11: #{tpu_custom_call.1} parent=5 // pred_region
        %s180 = ssub.s32 %s14, 1
        // Predicated region
        $region13: #{tpu_custom_call.1} parent=11 // pred_check
          %p181 = pneg %p75
        $region14: #{tpu_custom_call.1} parent=11 // pred_check_branch
          %183 = sbr.rel (%p181) target = $region16
        $region15: #{tpu_custom_call.1} parent=11 // pred_region
          _
        $region16: #{tpu_custom_call.1} parent=11 // pred_fallthru
          _
        // Predicated region
        $region17: #{tpu_custom_call.1} parent=11 // pred_check
          %p184 = pneg %p96
        $region18: #{tpu_custom_call.1} parent=11 // pred_check_branch
          %186 = sbr.rel (%p184) target = $region20
        $region19: #{tpu_custom_call.1} parent=11 // pred_region
          _
        $region20: #{tpu_custom_call.1} parent=11 // pred_fallthru
          _
        // Predicated region
        $region21: #{tpu_custom_call.1} parent=11 // pred_check
          %p187 = pneg %p117
        $region22: #{tpu_custom_call.1} parent=11 // pred_check_branch
          %189 = sbr.rel (%p187) target = $region24
        $region23: #{tpu_custom_call.1} parent=11 // pred_region
          _
        $region24: #{tpu_custom_call.1} parent=11 // pred_fallthru
          _
        // Predicated region
        $region25: #{tpu_custom_call.1} parent=11 // pred_check
          %p190 = pneg %p138
        $region26: #{tpu_custom_call.1} parent=11 // pred_check_branch
          %192 = sbr.rel (%p190) target = $region28
        $region27: #{tpu_custom_call.1} parent=11 // pred_region
          _
        $region28: #{tpu_custom_call.1} parent=11 // pred_fallthru
          _
      $region12: #{tpu_custom_call.1} parent=5 // pred_fallthru
        _
      %p193 = scmp.lt.s32.totalorder %s14, 2
      // Predicated region
      $region29: #{tpu_custom_call.1} parent=5 // pred_check
        %p194 = pneg %p193
      $region30: #{tpu_custom_call.1} parent=5 // pred_check_branch
        %196 = sbr.rel (%p194) target = $region32
      $region31: #{tpu_custom_call.1} parent=5 // pred_region
        // Predicated region
        $region33: #{tpu_custom_call.1} parent=31 // pred_check
          %p197 = pneg %p48
        $region34: #{tpu_custom_call.1} parent=31 // pred_check_branch
          %199 = sbr.rel (%p197) target = $region36
        $region35: #{tpu_custom_call.1} parent=31 // pred_region
          %s200 = smul.u32 2, %s22
          %p201 = scmp.lt.s32.totalorder %s21, 1
          %s202 = scalar_select %p201, %s21, 1
          %p203 = scmp.lt.s32.totalorder %s200, 1
          %s204 = scalar_select %p203, %s200, 1
          %s205 = smul.addr %s202, 2
          %s206 = sadd.s32 %s204, %s205
          %s207 = smul.addr %s206, 4
          %s208 = scalar_lea.vmem %s0, %s207
          %s209 = smul.u32 2, %s22
        $region36: #{tpu_custom_call.1} parent=31 // pred_fallthru
          _
      $region32: #{tpu_custom_call.1} parent=5 // pred_fallthru
        _
      %p210 = scmp.le.s32.totalorder 1, %s14
      %p211 = scmp.lt.s32.totalorder %s14, 3
      %p212 = pnand %p210, %p211
      %p213 = pneg %p212
      // Predicated region
      $region37: #{tpu_custom_call.1} parent=5 // pred_check
        _
      $region38: #{tpu_custom_call.1} parent=5 // pred_check_branch
        %215 = sbr.rel (%p212) target = $region40
      $region39: #{tpu_custom_call.1} parent=5 // pred_region
        %s216 = ssub.s32 %s14, 1
        %s217 = smul.u32 2, %s24
        %p218 = scmp.lt.s32.totalorder %s23, 1
        %s219 = scalar_select %p218, %s23, 1
        %p220 = scmp.lt.s32.totalorder %s217, 1
        %s221 = scalar_select %p220, %s217, 1
        %s222 = smul.addr %s219, 2
        %s223 = sadd.s32 %s221, %s222
        %s224 = smul.addr %s223, 4
        %s225 = scalar_lea.vmem %s0, %s224
        %p226 = pneg %p54
        %p227 = pneg %p51
        %p228 = pneg %p75
        %p229 = pneg %p72
        %p230 = pneg %p96
        %p231 = pneg %p93
        %p232 = pneg %p117
        %p233 = pneg %p114
        %p234 = pneg %p138
        %p235 = pneg %p135
        %p236 = pneg %p166
        %p237 = pneg %p163
        %s238 = sand.u32 %s153, 1
        %s239 = scalar_lea.sflag [#allocation3], %s238
        %s240 = sand.u32 %s153, 1
        %s241 = smul.addr %s240, 16
        %s242 = scalar_lea.vmem [#allocation2], %s241
        %s243 = smul.u32 2, %s24
        %p244 = scmp.lt.s32.totalorder %s23, 1
        %s245 = scalar_select %p244, %s23, 1
        %p246 = scmp.lt.s32.totalorder %s243, 1
        %s247 = scalar_select %p246, %s243, 1
        %s248 = smul.addr %s245, 2
        %s249 = sadd.s32 %s247, %s248
        %s250 = smul.addr %s249, 4
        %s251 = scalar_lea.vmem %s0, %s250
        %s252 = smul.u32 2, %s24
        %s253 = smul.u32 2, %s24
        %v255 = vld [vmem:[%s251] sm:$0xff]
        %v257 = vcombine.high %v255, %v255
        %v259 = vpack.c.bf16 %v255, %v255
        %v260 = vpack.c.bf16 %v257, %v257
        %v261 = vld [vmem:[%s1] sm:$0xf]
        %v262 = vld [vmem:[%s1 + $0x4] sm:$0xf]
        %v263 = vld [vmem:[%s1 + $0x8] sm:$0xf]
        %v264 = vld [vmem:[%s1 + $0xc] sm:$0xf]
        %v265 = vld [vmem:[%s2] sm:$0xff]
        %v266 = vld [vmem:[%s2 + $0x8] sm:$0xff]
        %v267 = vld [vmem:[%s2 + $0x10] sm:$0xff]
        %v268 = vld [vmem:[%s2 + $0x18] sm:$0xff]
        %270 = vset.pattern.permute.xlu0 0
        %271 = vperm.xlu0 %270, %v265
        %v272 = vpop.permute.xlu0 %271
        %275 = vset.pattern.permute.xlu0 0
        %276 = vperm.xlu0 %275, %v266
        %v277 = vpop.permute.xlu0 %276
        %280 = vset.pattern.permute.xlu0 0
        %281 = vperm.xlu0 %280, %v267
        %v282 = vpop.permute.xlu0 %281
        %285 = vset.pattern.permute.xlu0 0
        %286 = vperm.xlu0 %285, %v268
        %v287 = vpop.permute.xlu0 %286
        %v293 = vunpack.c.l.b16 %v261
        %v294 = vunpack.c.l.b16 %v262
        %v295 = vunpack.c.l.b16 %v263
        %v296 = vunpack.c.l.b16 %v264
        %v297 = vpack.c.b16 %v294, %v293
        %v298 = vpack.c.b16 %v296, %v295
        %vm299 = vcmask 31744
        %v301 = vsel %vm299, %v297, 0
        %v304 = vsel %vm299, %v298, 0
        %vm306 = vcmask 1041408
        %v308 = vsel %vm306, %v259, 0
        %v311 = vsel %vm306, %v260, 0
        %313 = vmatprep.subr.bf16.mxu0 0
        %314 = vmatpush1.bf16.msra.mxu0 0
        %315 = vmatprep.subr.bf16.mxu0 0
        %316 = vmatpush1.bf16.msra.mxu0 0
        %317 = vmatprep.subr.bf16.mxu0 0
        %318 = vmatpush1.bf16.msra.mxu0 0
        %319 = vmatprep.subr.bf16.mxu0 0
        %320 = vmatpush1.bf16.msra.mxu0 0
        %321 = vmatprep.subr.bf16.mxu0 0
        %322 = vmatpush1.bf16.msra.mxu0 0
        %323 = vmatprep.subr.bf16.mxu0 0
        %324 = vmatpush1.bf16.msra.mxu0 0
        %325 = vmatprep.subr.bf16.mxu0 0
        %326 = vmatpush1.bf16.msra.mxu0 0
        %327 = vmatprep.subr.bf16.mxu0 %v311
        %328 = vmatpush1.bf16.msra.mxu0 %v308
        %329 = vmatprep.subr.bf16.mxu0 0
        %330 = vmatpush2.bf16.msra.mxu0 0
        %331 = vmatprep.subr.bf16.mxu0 0
        %332 = vmatpush2.bf16.msra.mxu0 0
        %333 = vmatprep.subr.bf16.mxu0 0
        %334 = vmatpush2.bf16.msra.mxu0 0
        %335 = vmatprep.subr.bf16.mxu0 0
        %336 = vmatpush2.bf16.msra.mxu0 0
        %337 = vmatprep.subr.bf16.mxu0 0
        %338 = vmatpush2.bf16.msra.mxu0 0
        %339 = vmatprep.subr.bf16.mxu0 0
        %340 = vmatpush2.bf16.msra.mxu0 0
        %341 = vmatprep.subr.bf16.mxu0 0
        %342 = vmatpush2.bf16.msra.mxu0 0
        %343 = vmatprep.subr.bf16.mxu0 0
        %344 = vmatpush2.bf16.msra.mxu0 0
        %345 = vmatprep.mubr.bf16.mxu0 0
        %346 = vmatmul.mubr.bf16.gmra.mxu0 %v301
        %v347 = vpop.f32.mrf.mxu0
        %v348 = vadd.f32 %v272, %v347
        %v349 = vpop.f32.mrf.mxu0
        %v350 = vadd.f32 %v272, %v349
        %v351 = vpop.f32.mrf.mxu0
        %v352 = vadd.f32 %v277, %v351
        %v353 = vpop.f32.mrf.mxu0
        %v354 = vadd.f32 %v277, %v353
        %355 = vmatprep.mubr.bf16.mxu0 0
        %356 = vmatmul.mubr.bf16.gmra.mxu0 %v304
        %v357 = vpop.f32.mrf.mxu0
        %v358 = vadd.f32 %v282, %v357
        %v359 = vpop.f32.mrf.mxu0
        %v360 = vadd.f32 %v282, %v359
        %v361 = vpop.f32.mrf.mxu0
        %v362 = vadd.f32 %v287, %v361
        %v363 = vpop.f32.mrf.mxu0
        %v364 = vadd.f32 %v287, %v363
        %365 = vdwg.mxu0
        %v366 = vmax.f32 %v348, 0.0
        %v367 = vmax.f32 %v350, 0.0
        %v368 = vmax.f32 %v352, 0.0
        %v369 = vmax.f32 %v354, 0.0
        %v370 = vmax.f32 %v358, 0.0
        %v371 = vmax.f32 %v360, 0.0
        %v372 = vmax.f32 %v362, 0.0
        %v373 = vmax.f32 %v364, 0.0
        %v374 = vld [vmem:[%s3] sm:$0xf]
        %v375 = vld [vmem:[%s3 + $0x4] sm:$0xf]
        %v376 = vpack.c.bf16 %v368, %v366
        %v377 = vpack.c.bf16 %v369, %v367
        %v378 = vpack.c.bf16 %v372, %v370
        %v379 = vpack.c.bf16 %v373, %v371
        %v380 = vld [vmem:[%s4] sm:$0xff]
        %v381 = vld [vmem:[%s4 + $0x8] sm:$0xff]
        %383 = vset.pattern.permute.xlu0 0
        %384 = vperm.xlu0 %383, %v380
        %v385 = vpop.permute.xlu0 %384
        %388 = vset.pattern.permute.xlu0 0
        %389 = vperm.xlu0 %388, %v381
        %v390 = vpop.permute.xlu0 %389
        %v394 = vunpack.c.l.b16 %v374
        %v395 = vunpack.c.l.b16 %v375
        %v396 = vpack.c.b16 %v395, %v394
        %vm397 = vcmask 261120
        %v399 = vsel %vm397, %v396, 0
        %401 = vmatprep.subr.bf16.mxu0 0
        %402 = vmatpush1.bf16.msra.mxu0 0
        %403 = vmatprep.subr.bf16.mxu0 0
        %404 = vmatpush1.bf16.msra.mxu0 0
        %405 = vmatprep.subr.bf16.mxu0 0
        %406 = vmatpush1.bf16.msra.mxu0 0
        %407 = vmatprep.subr.bf16.mxu0 0
        %408 = vmatpush1.bf16.msra.mxu0 0
        %409 = vmatprep.subr.bf16.mxu0 0
        %410 = vmatpush1.bf16.msra.mxu0 0
        %411 = vmatprep.subr.bf16.mxu0 0
        %412 = vmatpush1.bf16.msra.mxu0 0
        %413 = vmatprep.subr.bf16.mxu0 %v379
        %414 = vmatpush1.bf16.msra.mxu0 %v378
        %415 = vmatprep.subr.bf16.mxu0 %v377
        %416 = vmatpush1.bf16.msra.mxu0 %v376
        %417 = vmatprep.subr.bf16.mxu0 0
        %418 = vmatpush2.bf16.msra.mxu0 0
        %419 = vmatprep.subr.bf16.mxu0 0
        %420 = vmatpush2.bf16.msra.mxu0 0
        %421 = vmatprep.subr.bf16.mxu0 0
        %422 = vmatpush2.bf16.msra.mxu0 0
        %423 = vmatprep.subr.bf16.mxu0 0
        %424 = vmatpush2.bf16.msra.mxu0 0
        %425 = vmatprep.subr.bf16.mxu0 0
        %426 = vmatpush2.bf16.msra.mxu0 0
        %427 = vmatprep.subr.bf16.mxu0 0
        %428 = vmatpush2.bf16.msra.mxu0 0
        %429 = vmatprep.subr.bf16.mxu0 0
        %430 = vmatpush2.bf16.msra.mxu0 0
        %431 = vmatprep.subr.bf16.mxu0 0
        %432 = vmatpush2.bf16.msra.mxu0 0
        %433 = vmatprep.mubr.bf16.mxu0 0
        %434 = vmatmul.mubr.bf16.gmra.mxu0 %v399
        %v435 = vpop.f32.mrf.mxu0
        %v436 = vadd.f32 %v385, %v435
        %v437 = vpop.f32.mrf.mxu0
        %v438 = vadd.f32 %v385, %v437
        %v439 = vpop.f32.mrf.mxu0
        %v440 = vadd.f32 %v390, %v439
        %v441 = vpop.f32.mrf.mxu0
        %v442 = vadd.f32 %v390, %v441
        %443 = vdwg.mxu0
        %v444 = vrot.slane %v440, 4
        %v445 = vmax.f32 %v440, %v444
        %v446 = vrot.slane %v445, 2
        %v447 = vmax.f32 %v445, %v446
        %v448 = vrot.slane %v447, 1
        %v449 = vmax.f32 %v447, %v448
        %v450 = vrot.slane %v442, 4
        %v451 = vmax.f32 %v442, %v450
        %v452 = vrot.slane %v451, 2
        %v453 = vmax.f32 %v451, %v452
        %v454 = vrot.slane %v453, 1
        %v455 = vmax.f32 %v453, %v454
        %v456 = vsub.f32 %v440, %v449
        %v457 = vsub.f32 %v442, %v455
        %v458 = vmul.f32 %v456, 1.442695
        %v459 = vpow.pop %v458
        %v460 = vmul.f32 %v457, 1.442695
        %v461 = vpow.pop %v460
        %v462 = vrot.slane %v459, 4
        %v463 = vadd.f32 %v459, %v462
        %v464 = vrot.slane %v463, 2
        %v465 = vadd.f32 %v463, %v464
        %v466 = vrot.slane %v465, 1
        %v467 = vadd.f32 %v465, %v466
        %v468 = vrot.slane %v461, 4
        %v469 = vadd.f32 %v461, %v468
        %v470 = vrot.slane %v469, 2
        %v471 = vadd.f32 %v469, %v470
        %v472 = vrot.slane %v471, 1
        %v473 = vadd.f32 %v471, %v472
        %v474 = vrcp.pop %v467
        %v475 = vrcp.pop %v473
        %v476 = vmin.f32 %v474, 1.0
        %v477 = vmin.f32 %v475, 1.0
        %v478 = vlaneseq
        %v479 = vshrl.u32 %v478, 7
        %vm480 = vcmp.eq.f32.partialorder %v440, %v449
        %vm481 = vcmp.eq.f32.partialorder %v442, %v455
        %v482 = vsel %vm480, %v479, 8
        %v483 = vsel %vm481, %v479, 8
        %v484 = vrot.slane %v482, 4
        %vm485 = vcmp.lt.s32.totalorder %v482, %v484
        %v486 = vsel %vm485, %v482, %v484
        %v487 = vrot.slane %v486, 2
        %vm488 = vcmp.lt.s32.totalorder %v486, %v487
        %v489 = vsel %vm488, %v486, %v487
        %v490 = vrot.slane %v489, 1
        %vm491 = vcmp.lt.s32.totalorder %v489, %v490
        %v492 = vsel %vm491, %v489, %v490
        %v493 = vrot.slane %v483, 4
        %vm494 = vcmp.lt.s32.totalorder %v483, %v493
        %v495 = vsel %vm494, %v483, %v493
        %v496 = vrot.slane %v495, 2
        %vm497 = vcmp.lt.s32.totalorder %v495, %v496
        %v498 = vsel %vm497, %v495, %v496
        %v499 = vrot.slane %v498, 1
        %vm500 = vcmp.lt.s32.totalorder %v498, %v499
        %v501 = vsel %vm500, %v498, %v499
        %s504 = smul.u32 %s24, 256
        %v505 = vlaneseq
        %v506 = vand.u32 %v505, 127
        %v507 = vadd.s32 %v506, 128
        %v508 = vstv %s504
        %v509 = vadd.s32 %v508, %v506
        %v510 = vadd.s32 %v508, %v507
        %v511 = vshra.s32 %v509, 4
        %v512 = vshra.s32 %v510, 4
        %v513 = vcvt.s32.f32 %v511
        %v514 = vcvt.s32.f32 %v512
        %v515 = vadd.f32 %v513, 0.5
        %v516 = vadd.f32 %v514, 0.5
        %v517 = vand.u32 %v509, 15
        %v518 = vand.u32 %v510, 15
        %v519 = vcvt.s32.f32 %v517
        %v520 = vcvt.s32.f32 %v518
        %v521 = vadd.f32 %v519, 0.5
        %v522 = vadd.f32 %v520, 0.5
        %v523 = vand.u32 %v479, 1
        %vm524 = vcmp.eq.s32.totalorder %v523, 0
        %v525 = vsel %vm524, %v521, %v515
        %v526 = vsel %vm524, %v522, %v516
        %v527 = vadd.f32 %v436, %v525
        %v528 = vadd.f32 %v438, %v526
        %vm529 = vcmask 1043456
        %v530 = vsel %vm529, %v527, %v476
        %v531 = vsel %vm529, %v528, %v477
        %vm532 = vcmask 1044480
        %v533 = vsel %vm532, %v530, %v492
        %v534 = vsel %vm532, %v531, %v501
        %vm535 = vcmask 1045504
        %v536 = vsel %vm535, %v533, 0.0
        %v537 = vsel %vm535, %v534, 0.0
        %538 = vst [vmem:[%s242] sm:$0xff] %v536
        %539 = vst [vmem:[%s242 + $0x8] sm:$0xff] %v537
        %s540 = sand.u32 %s153, 1
        %s541 = scalar_lea.sflag [#allocation3], %s540
        %s542 = sand.u32 %s153, 1
        %s543 = smul.addr %s542, 16
        %s544 = scalar_lea.vmem [#allocation2], %s543
        // Predicated region
        $region41: #{tpu_custom_call.1} parent=39 // pred_check
          %p545 = pneg %p163
        $region42: #{tpu_custom_call.1} parent=39 // pred_check_branch
          %547 = sbr.rel (%p545) target = $region44
        $region43: #{tpu_custom_call.1} parent=39 // pred_region
          %s548 = smul.u32 2, %s24
          %s550 = ssub.s32 256, 256
          %551 = vsyncadd %s541, %s550
          %s552 = smul.addr %s23, 2
          %s553 = sadd.s32 %s548, %s552
          %s554 = smul.addr %s553, 128
          %s555 = scalar_lea.hbm %s5, %s554
          %s557 = sshll.u32 %s544, 4
          %s558 = int_to_ptr.vmem [resolvable:$true] %s557
          %560 = dma.vmem_to_hbm [thread:$0]  %s558, 256, %s555, %s541
        $region44: #{tpu_custom_call.1} parent=39 // pred_fallthru
          _
      $region40: #{tpu_custom_call.1} parent=5 // pred_fallthru
        _
      %p561 = scmp.le.s32.totalorder 2, %s14
      // Predicated region
      $region45: #{tpu_custom_call.1} parent=5 // pred_check
        %p562 = pneg %p561
      $region46: #{tpu_custom_call.1} parent=5 // pred_check_branch
        %564 = sbr.rel (%p562) target = $region48
      $region47: #{tpu_custom_call.1} parent=5 // pred_region
        %s565 = ssub.s32 %s14, 2
        // Predicated region
        $region49: #{tpu_custom_call.1} parent=47 // pred_check
          %p566 = pneg %p169
        $region50: #{tpu_custom_call.1} parent=47 // pred_check_branch
          %568 = sbr.rel (%p566) target = $region52
        $region51: #{tpu_custom_call.1} parent=47 // pred_region
          %s569 = sand.u32 %s154, 1
          %s570 = scalar_lea.sflag [#allocation3], %s569
          %s571 = sand.u32 %s154, 1
          %s572 = smul.addr %s571, 16
          %s573 = scalar_lea.vmem [#allocation2], %s572
          %574 = dma.done %s570, 256
        $region52: #{tpu_custom_call.1} parent=47 // pred_fallthru
          _
      $region48: #{tpu_custom_call.1} parent=5 // pred_fallthru
        _
    $region6: #{tpu_custom_call.1} parent=1 // loop_footer
      %s18 = sadd.s32 1, %s14
    $region7: #{tpu_custom_call.1} parent=1 // loop_footer_branch
      %13 = sbr.rel target = $region3
    $region8: #{tpu_custom_call.1} parent=1 // loop_exit
      _
    %575 = vsyncpa [#allocation3], 1
    %s576 = scalar_lea.sflag [#allocation3], 1
    %577 = vsyncpa %s576, 1

</llo_original>
